<compile_context>
chip_gen: v7x
topology: tpu7x:2x2x1
jax: 0.10.0
libtpu: 0.0.40
codegen_flags: <defaults>
</compile_context>

<pallas_src>
import functools

import jax
import jax.numpy as jnp
from jax.experimental import pallas as pl
from jax.experimental.pallas import tpu as pltpu


# --------------------------------------------------------------------------
# helpers
# --------------------------------------------------------------------------
def _round_up(n: int, k: int) -> int:
    return ((n + k - 1) // k) * k


def _pick_tile(total: int, max_tile: int, align: int):
    """Largest multiple of `align` <= max_tile that divides `total`, else None."""
    cand = min(max_tile, total)
    cand -= cand % align
    while cand >= align:
        if total % cand == 0:
            return cand
        cand -= align
    return None


def _vmem_capacity_bytes() -> int:
    """Per-core VMEM capacity; conservative (v7x-safe) fallback if unknown."""
    try:
        info = pltpu.get_tpu_info()
        cap = getattr(info, "vmem_capacity_bytes", None)
        if cap is not None and cap > 0:
            return int(cap)
    except Exception:
        pass
    return 64 * 1024 * 1024  # v7x per-TensorCore physical VMEM


def _vmem_footprint(tm: int, tn: int, D: int, cdt_bytes: int, out_bytes: int) -> int:
    """Double-buffered pipeline buffers + resident f32 accumulator."""
    x_bufs = 2 * tm * D * cdt_bytes           # x tile, 2 buffers
    w13_bufs = 2 * 2 * D * tn * cdt_bytes     # (2, D, tn) weight tile, 2 buffers
    w2_bufs = 2 * tn * D * cdt_bytes          # (tn, D) weight tile, 2 buffers
    o_bufs = 2 * tm * D * out_bytes           # output tile, 2 buffers
    acc = tm * D * 4                          # f32 accumulator scratch
    return x_bufs + w13_bufs + w2_bufs + o_bufs + acc


# --------------------------------------------------------------------------
# one-time weight preparation (weights are static parameters)
# --------------------------------------------------------------------------
def prepare_ffn_weights(w1w3_weight, w2_weight, *, compute_dtype=jnp.bfloat16,
                        lane_align: int = 128):
    """PyTorch layout -> kernel layout, done ONCE (not per call).

    w1w3_weight: (2I, D)  ->  w13_t: (2, D, I_pad)   (so x @ w13_t[j] is MK@KN)
    w2_weight:   (D, I)   ->  w2_t:  (I_pad, D)      (so g @ w2_t     is MK@KN)

    I is zero-padded to a multiple of `lane_align`; padded intermediate
    channels contribute exactly zero to the output (silu(0)*0 = 0, and the
    padded w2 rows are zero).
    """
    two_i, D = w1w3_weight.shape
    inter = two_i // 2
    assert w2_weight.shape == (D, inter)

    inter_p = _round_up(inter, lane_align)
    w13 = w1w3_weight.reshape(2, inter, D)
    w2 = w2_weight
    if inter_p != inter:
        w13 = jnp.pad(w13, ((0, 0), (0, inter_p - inter), (0, 0)))
        w2 = jnp.pad(w2, ((0, 0), (0, inter_p - inter)))

    w13_t = jnp.swapaxes(w13, 1, 2).astype(compute_dtype)  # (2, D, I_pad)
    w2_t = jnp.swapaxes(w2, 0, 1).astype(compute_dtype)    # (I_pad, D)
    return w13_t, w2_t


# --------------------------------------------------------------------------
# kernel
# --------------------------------------------------------------------------
def ffn_kernel(x_ref, w13_ref, w2_ref, o_ref, acc_ref):
    # x_ref:   (TM, D)     bf16 token tile (resident across the I axis)
    # w13_ref: (2, D, TN)  bf16 pre-transposed [w1.T ; w3.T] I-tile (streamed)
    # w2_ref:  (TN, D)     bf16 pre-transposed down-proj I-tile (streamed)
    # o_ref:   (TM, D)     output tile (resident across the I axis)
    # acc_ref: (TM, D) f32 VMEM accumulator
    k = pl.program_id(1)

    @pl.when(k == 0)
    def _():
        acc_ref[...] = jnp.zeros_like(acc_ref)

    x = x_ref[...]                                                   # (TM, D)

    # Plain (M,K)@(K,N) matmuls — no transposed RHS, no per-tile XLU work.
    h1 = jnp.dot(x, w13_ref[0], preferred_element_type=jnp.float32)  # (TM, TN)
    h3 = jnp.dot(x, w13_ref[1], preferred_element_type=jnp.float32)  # (TM, TN)

    # SiLU gating in f32, back to bf16 for the second MXU pass.
    gated = (h1 * jax.nn.sigmoid(h1) * h3).astype(w2_ref.dtype)      # (TM, TN)

    acc_ref[...] += jnp.dot(gated, w2_ref[...],
                            preferred_element_type=jnp.float32)      # (TM, D)

    @pl.when(k == pl.num_programs(1) - 1)
    def _():
        o_ref[...] = acc_ref[...].astype(o_ref.dtype)


# --------------------------------------------------------------------------
# wrapper
# --------------------------------------------------------------------------
def feed_forward(x, w13_t, w2_t, *, tm=512, tn=512,
                 compute_dtype=jnp.bfloat16, vmem_budget_bytes=None):
    """x: (B, S, D). w13_t: (2, D, I_pad), w2_t: (I_pad, D) from prepare_ffn_weights."""
    B, S, D = x.shape
    two, d_in, inter = w13_t.shape
    assert two == 2 and d_in == D
    assert w2_t.shape == (inter, D)
    assert inter % 128 == 0, "use prepare_ffn_weights (pads I to a 128 multiple)"

    # Defensive cast only (no-op when weights were prepared once up front).
    if w13_t.dtype != compute_dtype:
        w13_t = w13_t.astype(compute_dtype)
    if w2_t.dtype != compute_dtype:
        w2_t = w2_t.astype(compute_dtype)

    M = B * S
    out_dtype = x.dtype
    out_bytes = jnp.dtype(out_dtype).itemsize
    cdt_bytes = jnp.dtype(compute_dtype).itemsize

    # ---- generation-aware VMEM budget ------------------------------------
    cap = _vmem_capacity_bytes()
    if vmem_budget_bytes is None:
        vmem_budget_bytes = (cap * 3) // 4       # headroom for Mosaic scratch

    # ---- tile selection ----------------------------------------------------
    # tn: prefer 256 alignment (v6e/v7x MXU tile), fall back to 128 (v5e-fine).
    tn_eff = _pick_tile(inter, tn, 256)
    if tn_eff is None:
        tn_eff = _pick_tile(inter, tn, 128)
    assert tn_eff is not None

    # tm: multiple of 16 (bf16 sublane packing), capped by padded M.
    tm_eff = max(16, min(_round_up(M, 16), _round_up(tm, 16)))

    def _fits(tm_c, tn_c):
        return _vmem_footprint(tm_c, tn_c, D, cdt_bytes, out_bytes) <= vmem_budget_bytes

    # Shrink tm first (it sets arithmetic intensity but is cheapest to trade),
    # then tn as a last resort, never below 128 lanes.
    while tm_eff > 16 and not _fits(tm_eff, tn_eff):
        tm_eff = max(16, _round_up(tm_eff // 2, 16))
    while tn_eff > 128 and not _fits(tm_eff, tn_eff):
        smaller = _pick_tile(inter, tn_eff // 2, 128)
        if smaller is None or smaller >= tn_eff:
            break
        tn_eff = smaller

    M_pad = _round_up(M, tm_eff)
    grid = (M_pad // tm_eff, inter // tn_eff)

    # ---- activations: cast + pad per call (weights are already prepared) ---
    x2d = x.reshape(M, D).astype(compute_dtype)
    if M_pad != M:
        x2d = jnp.pad(x2d, ((0, M_pad - M), (0, 0)))

    vmem_limit = int(max(32 * 1024 * 1024,
                         min(cap, vmem_budget_bytes + 8 * 1024 * 1024)))

    cost = pl.CostEstimate(
        flops=6 * M_pad * inter * D,            # 3 matmuls x 2*M*I*D
        transcendentals=M_pad * inter,          # sigmoid
        bytes_accessed=(x2d.size * cdt_bytes
                        + w13_t.size * cdt_bytes
                        + w2_t.size * cdt_bytes
                        + M_pad * D * out_bytes),
    )

    out2d = pl.pallas_call(
        ffn_kernel,
        out_shape=jax.ShapeDtypeStruct((M_pad, D), out_dtype),
        grid_spec=pltpu.PrefetchScalarGridSpec(
            num_scalar_prefetch=0,
            grid=grid,
            in_specs=[
                pl.BlockSpec((tm_eff, D), lambda i, k: (i, 0)),        # x tile
                pl.BlockSpec((2, D, tn_eff), lambda i, k: (0, 0, k)),  # w1/w3 tile
                pl.BlockSpec((tn_eff, D), lambda i, k: (k, 0)),        # w2 tile
            ],
            out_specs=pl.BlockSpec((tm_eff, D), lambda i, k: (i, 0)),
            scratch_shapes=[pltpu.VMEM((tm_eff, D), jnp.float32)],
        ),
        compiler_params=pltpu.CompilerParams(
            dimension_semantics=("parallel", "arbitrary"),
            vmem_limit_bytes=vmem_limit,
        ),
        cost_estimate=cost,
    )(x2d, w13_t, w2_t)

    if M_pad != M:
        out2d = out2d[:M]
    return out2d.reshape(B, S, D)


# Convenience: accepts raw PyTorch-layout weights (prep happens per call;
# prefer prepare_ffn_weights once + feed_forward in real use).
def feed_forward_from_torch_layout(x, w1w3_weight, w2_weight, **kw):
    w13_t, w2_t = prepare_ffn_weights(w1w3_weight, w2_weight)
    return feed_forward(x, w13_t, w2_t, **kw)


# --------------------------------------------------------------------------
# references
# --------------------------------------------------------------------------
def feed_forward_ref_f32(x, w1w3_weight, w2_weight):
    h = jnp.einsum("bsd,ed->bse", x, w1w3_weight)
    inter = w1w3_weight.shape[0] // 2
    g = jax.nn.silu(h[..., :inter]) * h[..., inter:]
    return jnp.einsum("bsi,di->bsd", g, w2_weight)


def feed_forward_ref_matched(x, w1w3_weight, w2_weight):
    # Matches the kernel's numerics: bf16 operands, f32 accumulation / gating.
    xb = x.astype(jnp.bfloat16)
    w13b = w1w3_weight.astype(jnp.bfloat16)
    w2b = w2_weight.astype(jnp.bfloat16)
    h = jnp.einsum("bsd,ed->bse", xb, w13b, preferred_element_type=jnp.float32)
    inter = w1w3_weight.shape[0] // 2
    g = jax.nn.silu(h[..., :inter]) * h[..., inter:]
    out = jnp.einsum("bsi,di->bsd", g.astype(jnp.bfloat16), w2b,
                     preferred_element_type=jnp.float32)
    return out.astype(x.dtype)


if __name__ == "__main__":
    # Small config consistent with the module (dim=D, intermediate_size=I,
    # I a multiple of 256 as in ModelArgs.__post_init__).
    B, S, D, I = 2, 8, 256, 512

    key = jax.random.PRNGKey(0)
    kx, k13, k2 = jax.random.split(key, 3)

    x = jax.random.normal(kx, (B, S, D), dtype=jnp.float32)
    # nn.Linear weight layouts: w1w3.weight -> (2I, D), w2.weight -> (D, I)
    w1w3_weight = jax.random.normal(k13, (2 * I, D), dtype=jnp.float32) * 0.02
    w2_weight = jax.random.normal(k2, (D, I), dtype=jnp.float32) * 0.02

    # One-time weight preparation (transpose + bf16 cast) — static parameters.
    w13_t, w2_t = prepare_ffn_weights(w1w3_weight, w2_weight)
    w13_t, w2_t = jax.block_until_ready((w13_t, w2_t))

    out = feed_forward(x, w13_t, w2_t)
    out = jax.block_until_ready(out)
    assert out.shape == (B, S, D)

    # Tight check vs matched-precision (bf16 operands, f32 accumulation) ref.
    ref_m = feed_forward_ref_matched(x, w1w3_weight, w2_weight)
    assert jnp.allclose(out, ref_m, atol=2e-3, rtol=2e-2)

    # Looser check vs the pure-f32 PyTorch-equivalent reference.
    ref_f = feed_forward_ref_f32(x, w1w3_weight, w2_weight)
    assert jnp.allclose(out, ref_f, atol=1e-2, rtol=1e-1)

    print("KERNEL_OK")
</pallas_src>

<mosaic_0001>
module attributes {stable_mosaic.version = 11 : i64} {
  func.func @ffn_kernel(%arg0: i32, %arg1: i32, %arg2: memref<16x256xbf16, #tpu.memory_space<vmem>>, %arg3: memref<2x256x512xbf16, #tpu.memory_space<vmem>>, %arg4: memref<512x256xbf16, #tpu.memory_space<vmem>>, %arg5: memref<16x256xf32, #tpu.memory_space<vmem>>, %arg6: memref<16x256xf32, #tpu.memory_space<vmem>>) attributes {dimension_semantics = [#tpu.dimension_semantics<parallel>, #tpu.dimension_semantics<arbitrary>], iteration_bounds = array<i64: 1, 1>, scalar_prefetch = 0 : i64, scratch_operands = 1 : i64, tpu.core_type = #tpu.core_type<tc>, window_params = [{transform_indices = @transform_0, window_bounds = array<i64: 16, 256>}, {transform_indices = @transform_1, window_bounds = array<i64: 2, 256, 512>}, {transform_indices = @transform_2, window_bounds = array<i64: 512, 256>}, {transform_indices = @transform_3, window_bounds = array<i64: 16, 256>}]} {
    %c0_i32 = arith.constant 0 : i32
    %0 = arith.cmpi eq, %arg1, %c0_i32 : i32
    %1 = arith.extui %0 : i1 to i32
    %c0_i32_0 = arith.constant 0 : i32
    %2 = arith.cmpi ne, %1, %c0_i32_0 : i32
    scf.if %2 {
      %cst_18 = arith.constant 0.000000e+00 : f32
      %26 = vector.broadcast %cst_18 : f32 to vector<16x256xf32>
      %c0_19 = arith.constant 0 : index
      %c0_20 = arith.constant 0 : index
      %27 = vector.load %arg6[%c0_19, %c0_20] : memref<16x256xf32, #tpu.memory_space<vmem>>, vector<16x256xf32>
      tpu.vector_store %arg6[%c0_19, %c0_20], %26 {strides = array<i32>} : memref<16x256xf32, #tpu.memory_space<vmem>>, vector<16x256xf32>,
    } else {
    }
    %c0 = arith.constant 0 : index
    %c0_1 = arith.constant 0 : index
    %3 = vector.load %arg2[%c0, %c0_1] : memref<16x256xbf16, #tpu.memory_space<vmem>>, vector<16x256xbf16>
    %c0_2 = arith.constant 0 : index
    %c0_3 = arith.constant 0 : index
    %c0_4 = arith.constant 0 : index
    %4 = vector.load %arg3[%c0_2, %c0_3, %c0_4] : memref<2x256x512xbf16, #tpu.memory_space<vmem>>, vector<1x256x512xbf16>
    %5 = vector.shape_cast %4 : vector<1x256x512xbf16> to vector<256x512xbf16>
    %cst = arith.constant dense<0.000000e+00> : vector<16x512xf32>
    %6 = tpu.matmul %3, %5, %cst {dimension_numbers = #tpu.dot_dimension_numbers<[1], [0], [0], [1], [0, 0, 1, 1], [], []>} : vector<16x256xbf16>, vector<256x512xbf16>, vector<16x512xf32> -> vector<16x512xf32>
    %c1 = arith.constant 1 : index
    %c0_5 = arith.constant 0 : index
    %c0_6 = arith.constant 0 : index
    %7 = vector.load %arg3[%c1, %c0_5, %c0_6] : memref<2x256x512xbf16, #tpu.memory_space<vmem>>, vector<1x256x512xbf16>
    %8 = vector.shape_cast %7 : vector<1x256x512xbf16> to vector<256x512xbf16>
    %cst_7 = arith.constant dense<0.000000e+00> : vector<16x512xf32>
    %9 = tpu.matmul %3, %8, %cst_7 {dimension_numbers = #tpu.dot_dimension_numbers<[1], [0], [0], [1], [0, 0, 1, 1], [], []>} : vector<16x256xbf16>, vector<256x512xbf16>, vector<16x512xf32> -> vector<16x512xf32>
    %10 = arith.negf %6 : vector<16x512xf32>
    %11 = math.exp %10 : vector<16x512xf32>
    %cst_8 = arith.constant 1.000000e+00 : f32
    %12 = vector.broadcast %cst_8 : f32 to vector<16x512xf32>
    %13 = arith.addf %12, %11 : vector<16x512xf32>
    %14 = arith.divf %12, %13 : vector<16x512xf32>
    %15 = arith.mulf %6, %14 : vector<16x512xf32>
    %16 = arith.mulf %15, %9 : vector<16x512xf32>
    %17 = arith.truncf %16 : vector<16x512xf32> to vector<16x512xbf16>
    %c0_9 = arith.constant 0 : index
    %c0_10 = arith.constant 0 : index
    %18 = vector.load %arg6[%c0_9, %c0_10] : memref<16x256xf32, #tpu.memory_space<vmem>>, vector<16x256xf32>
    %c0_11 = arith.constant 0 : index
    %c0_12 = arith.constant 0 : index
    %19 = vector.load %arg4[%c0_11, %c0_12] : memref<512x256xbf16, #tpu.memory_space<vmem>>, vector<512x256xbf16>
    %cst_13 = arith.constant dense<0.000000e+00> : vector<16x256xf32>
    %20 = tpu.matmul %17, %19, %cst_13 {dimension_numbers = #tpu.dot_dimension_numbers<[1], [0], [0], [1], [0, 0, 1, 1], [], []>} : vector<16x512xbf16>, vector<512x256xbf16>, vector<16x256xf32> -> vector<16x256xf32>
    %21 = arith.addf %18, %20 : vector<16x256xf32>
    %c0_14 = arith.constant 0 : index
    %c0_15 = arith.constant 0 : index
    %22 = vector.load %arg6[%c0_14, %c0_15] : memref<16x256xf32, #tpu.memory_space<vmem>>, vector<16x256xf32>
    tpu.vector_store %arg6[%c0_14, %c0_15], %21 {strides = array<i32>} : memref<16x256xf32, #tpu.memory_space<vmem>>, vector<16x256xf32>,
    %c0_i32_16 = arith.constant 0 : i32
    %23 = arith.cmpi eq, %arg1, %c0_i32_16 : i32
    %24 = arith.extui %23 : i1 to i32
    %c0_i32_17 = arith.constant 0 : i32
    %25 = arith.cmpi ne, %24, %c0_i32_17 : i32
    scf.if %25 {
      %c0_18 = arith.constant 0 : index
      %c0_19 = arith.constant 0 : index
      %26 = vector.load %arg6[%c0_18, %c0_19] : memref<16x256xf32, #tpu.memory_space<vmem>>, vector<16x256xf32>
      %c0_20 = arith.constant 0 : index
      %c0_21 = arith.constant 0 : index
      %27 = vector.load %arg5[%c0_20, %c0_21] : memref<16x256xf32, #tpu.memory_space<vmem>>, vector<16x256xf32>
      tpu.vector_store %arg5[%c0_20, %c0_21], %26 {strides = array<i32>} : memref<16x256xf32, #tpu.memory_space<vmem>>, vector<16x256xf32>,
    } else {
    }
    return
  }
  func.func @transform_0(%arg0: i32, %arg1: i32) -> (i32, i32) {
    %c0_i32 = arith.constant 0 : i32
    %c0_i32_0 = arith.constant 0 : i32
    return %arg0, %c0_i32 : i32, i32
  }
  func.func @transform_1(%arg0: i32, %arg1: i32) -> (i32, i32, i32) {
    %c0_i32 = arith.constant 0 : i32
    %c0_i32_0 = arith.constant 0 : i32
    %c0_i32_1 = arith.constant 0 : i32
    return %c0_i32, %c0_i32_0, %arg1 : i32, i32, i32
  }
  func.func @transform_2(%arg0: i32, %arg1: i32) -> (i32, i32) {
    %c0_i32 = arith.constant 0 : i32
    %c0_i32_0 = arith.constant 0 : i32
    return %arg1, %c0_i32 : i32, i32
  }
  func.func @transform_3(%arg0: i32, %arg1: i32) -> (i32, i32) {
    %c0_i32 = arith.constant 0 : i32
    %c0_i32_0 = arith.constant 0 : i32
    return %arg0, %c0_i32 : i32, i32
  }
}

</mosaic_0001>

<llo_original>
// kernel: tpu_custom_call.1
$region0: #{tpu_custom_call.1}
  #allocation0 [shape = 'u32[]', space=smem, size = 0x4, offset = 0x4, fixed_abs, tag = 'smem constant byte address 0x4 - core index']
  #allocation1 [shape = 'u32[144,128]{1,0:T(1,128)}', space=vmem, size = 0x12000, scoped, tag = 'internal scratch']
  #allocation2 [shape = 'f32[16,256]{1,0:T(8,128)}', space=vmem, size = 0x4000, scoped, tag = 'scratch operand']
  %s0 = inlined_call_operand.hbm [shape: bf16[16,256], index: 0, kind: input, shape index: {}]
  %s1 = inlined_call_operand.hbm [shape: bf16[2,256,512], index: 1, kind: input, shape index: {}]
  %s2 = inlined_call_operand.hbm [shape: bf16[512,256], index: 2, kind: input, shape index: {}]
  %s3 = inlined_call_operand.hbm [shape: f32[16,256], index: 3, kind: output, shape index: {}]
  %s4 = sld [smem:[#allocation0]]
  $region42: #{tpu_custom_call.1} parent=0
    _
  %s6 = ssub.s32 1, %s4
  %s7 = scalar_select 0, %s6, %s4
  $region1: #{tpu_custom_call.1} parent=0
    #allocation3 [shape = 'u8[8192]{0}', space=vmem, size = 0x2000, scoped, tag = 'input window, operand 0, single buffered']
    #allocation4 [shape = 's32[1]{0}', space=sflag, size = 0x4, scoped, tag = 'scoped memory for tpu_custom_call.1']
    #allocation5 [shape = 's32[1]{0}', space=sflag, size = 0x4, scoped, tag = 'scoped memory for tpu_custom_call.1']
    #allocation6 [shape = 'u8[524288]{0}', space=vmem, size = 0x80000, scoped, tag = 'input window, operand 1, single buffered']
    #allocation7 [shape = 's32[1]{0}', space=sflag, size = 0x4, scoped, tag = 'scoped memory for tpu_custom_call.1']
    #allocation8 [shape = 'u8[262144]{0}', space=vmem, size = 0x40000, scoped, tag = 'input window, operand 2, single buffered']
    #allocation9 [shape = 'u8[16384]{0}', space=vmem, size = 0x4000, scoped, tag = 'output window, operand 0, single buffered']
    %8 = vsyncpa [#allocation4], 0
    %9 = vsyncpa [#allocation7], 0
    %10 = vsyncpa [#allocation5], 0
    // Predicated region
    $region2: #{tpu_custom_call.1} parent=1 // pred_check
      _
    $region3: #{tpu_custom_call.1} parent=1 // pred_check_branch
      %12 = sbr.rel (0) target = $region5
    $region4: #{tpu_custom_call.1} parent=1 // pred_region
      %s14 = ssub.s32 256, 256
      %15 = vsyncadd [#allocation4], %s14
      %s16 = sshll.u32 [#allocation3], 4
      %s17 = int_to_ptr.vmem [resolvable:$true] %s16
      %22 = dma.hbm_to_vmem [thread:$0]  %s0, 256, %s17, [#allocation4], 128, 128, 8
    $region5: #{tpu_custom_call.1} parent=1 // pred_fallthru
      _
    // Predicated region
    $region6: #{tpu_custom_call.1} parent=1 // pred_check
      _
    $region7: #{tpu_custom_call.1} parent=1 // pred_check_branch
      %24 = sbr.rel (0) target = $region9
    $region8: #{tpu_custom_call.1} parent=1 // pred_region
      %s26 = ssub.s32 16384, 16384
      %27 = vsyncadd [#allocation7], %s26
      %s28 = sshll.u32 [#allocation6], 4
      %s29 = int_to_ptr.vmem [resolvable:$true] %s28
      %34 = dma.hbm_to_vmem [thread:$0]  %s1, 16384, %s29, [#allocation7], 256, 256, 16
    $region9: #{tpu_custom_call.1} parent=1 // pred_fallthru
      _
    // Predicated region
    $region10: #{tpu_custom_call.1} parent=1 // pred_check
      _
    $region11: #{tpu_custom_call.1} parent=1 // pred_check_branch
      %36 = sbr.rel (0) target = $region13
    $region12: #{tpu_custom_call.1} parent=1 // pred_region
      %s38 = ssub.s32 8192, 8192
      %39 = vsyncadd [#allocation7], %s38
      %s40 = sshll.u32 [#allocation8], 4
      %s41 = int_to_ptr.vmem [resolvable:$true] %s40
      %46 = dma.hbm_to_vmem [thread:$0]  %s2, 8192, %s41, [#allocation7], 128, 128, 8
    $region13: #{tpu_custom_call.1} parent=1 // pred_fallthru
      _
    // Predicated region
    $region14: #{tpu_custom_call.1} parent=1 // pred_check
      _
    $region15: #{tpu_custom_call.1} parent=1 // pred_check_branch
      %48 = sbr.rel (0) target = $region17
    $region16: #{tpu_custom_call.1} parent=1 // pred_region
      %49 = dma.done [#allocation4], 256
    $region17: #{tpu_custom_call.1} parent=1 // pred_fallthru
      _
    // Predicated region
    $region18: #{tpu_custom_call.1} parent=1 // pred_check
      _
    $region19: #{tpu_custom_call.1} parent=1 // pred_check_branch
      %51 = sbr.rel (0) target = $region21
    $region20: #{tpu_custom_call.1} parent=1 // pred_region
      %52 = dma.done [#allocation7], 16384
    $region21: #{tpu_custom_call.1} parent=1 // pred_fallthru
      _
    // Predicated region
    $region22: #{tpu_custom_call.1} parent=1 // pred_check
      _
    $region23: #{tpu_custom_call.1} parent=1 // pred_check_branch
      %54 = sbr.rel (0) target = $region25
    $region24: #{tpu_custom_call.1} parent=1 // pred_region
      %55 = dma.done [#allocation7], 8192
    $region25: #{tpu_custom_call.1} parent=1 // pred_fallthru
      _
    %p56 = scmp.eq.s32.totalorder 0, 0
    // Predicated region
    $region26: #{tpu_custom_call.1} parent=1 // pred_check
      %p57 = pneg %p56
    $region27: #{tpu_custom_call.1} parent=1 // pred_check_branch
      %59 = sbr.rel (%p57) target = $region29
    $region28: #{tpu_custom_call.1} parent=1 // pred_region
      %60 = vst [vmem:[#allocation2] sm:$0xff] 0.0
      %61 = vst [vmem:[#allocation2 + $0x8] sm:$0xff] 0.0
      %62 = vst [vmem:[#allocation2 + $0x10] sm:$0xff] 0.0
      %63 = vst [vmem:[#allocation2 + $0x18] sm:$0xff] 0.0
    $region29: #{tpu_custom_call.1} parent=1 // pred_fallthru
      _
    %v64 = vld [vmem:[#allocation3] sm:$0xff]
    %v65 = vld [vmem:[#allocation3 + $0x8] sm:$0xff]
    %v66 = vld [vmem:[#allocation6] sm:$0xff]
    %v67 = vld [vmem:[#allocation6 + $0x8] sm:$0xff]
    %v68 = vld [vmem:[#allocation6 + $0x10] sm:$0xff]
    %v69 = vld [vmem:[#allocation6 + $0x18] sm:$0xff]
    %v70 = vld [vmem:[#allocation6 + $0x20] sm:$0xff]
    %v71 = vld [vmem:[#allocation6 + $0x28] sm:$0xff]
    %v72 = vld [vmem:[#allocation6 + $0x30] sm:$0xff]
    %v73 = vld [vmem:[#allocation6 + $0x38] sm:$0xff]
    %v74 = vld [vmem:[#allocation6 + $0x40] sm:$0xff]
    %v75 = vld [vmem:[#allocation6 + $0x48] sm:$0xff]
    %v76 = vld [vmem:[#allocation6 + $0x50] sm:$0xff]
    %v77 = vld [vmem:[#allocation6 + $0x58] sm:$0xff]
    %v78 = vld [vmem:[#allocation6 + $0x60] sm:$0xff]
    %v79 = vld [vmem:[#allocation6 + $0x68] sm:$0xff]
    %v80 = vld [vmem:[#allocation6 + $0x70] sm:$0xff]
    %v81 = vld [vmem:[#allocation6 + $0x78] sm:$0xff]
    %v82 = vld [vmem:[#allocation6 + $0x80] sm:$0xff]
    %v83 = vld [vmem:[#allocation6 + $0x88] sm:$0xff]
    %v84 = vld [vmem:[#allocation6 + $0x90] sm:$0xff]
    %v85 = vld [vmem:[#allocation6 + $0x98] sm:$0xff]
    %v86 = vld [vmem:[#allocation6 + $0xa0] sm:$0xff]
    %v87 = vld [vmem:[#allocation6 + $0xa8] sm:$0xff]
    %v88 = vld [vmem:[#allocation6 + $0xb0] sm:$0xff]
    %v89 = vld [vmem:[#allocation6 + $0xb8] sm:$0xff]
    %v90 = vld [vmem:[#allocation6 + $0xc0] sm:$0xff]
    %v91 = vld [vmem:[#allocation6 + $0xc8] sm:$0xff]
    %v92 = vld [vmem:[#allocation6 + $0xd0] sm:$0xff]
    %v93 = vld [vmem:[#allocation6 + $0xd8] sm:$0xff]
    %v94 = vld [vmem:[#allocation6 + $0xe0] sm:$0xff]
    %v95 = vld [vmem:[#allocation6 + $0xe8] sm:$0xff]
    %v96 = vld [vmem:[#allocation6 + $0xf0] sm:$0xff]
    %v97 = vld [vmem:[#allocation6 + $0xf8] sm:$0xff]
    %v98 = vld [vmem:[#allocation6 + $0x100] sm:$0xff]
    %v99 = vld [vmem:[#allocation6 + $0x108] sm:$0xff]
    %v100 = vld [vmem:[#allocation6 + $0x110] sm:$0xff]
    %v101 = vld [vmem:[#allocation6 + $0x118] sm:$0xff]
    %v102 = vld [vmem:[#allocation6 + $0x120] sm:$0xff]
    %v103 = vld [vmem:[#allocation6 + $0x128] sm:$0xff]
    %v104 = vld [vmem:[#allocation6 + $0x130] sm:$0xff]
    %v105 = vld [vmem:[#allocation6 + $0x138] sm:$0xff]
    %v106 = vld [vmem:[#allocation6 + $0x140] sm:$0xff]
    %v107 = vld [vmem:[#allocation6 + $0x148] sm:$0xff]
    %v108 = vld [vmem:[#allocation6 + $0x150] sm:$0xff]
    %v109 = vld [vmem:[#allocation6 + $0x158] sm:$0xff]
    %v110 = vld [vmem:[#allocation6 + $0x160] sm:$0xff]
    %v111 = vld [vmem:[#allocation6 + $0x168] sm:$0xff]
    %v112 = vld [vmem:[#allocation6 + $0x170] sm:$0xff]
    %v113 = vld [vmem:[#allocation6 + $0x178] sm:$0xff]
    %v114 = vld [vmem:[#allocation6 + $0x180] sm:$0xff]
    %v115 = vld [vmem:[#allocation6 + $0x188] sm:$0xff]
    %v116 = vld [vmem:[#allocation6 + $0x190] sm:$0xff]
    %v117 = vld [vmem:[#allocation6 + $0x198] sm:$0xff]
    %v118 = vld [vmem:[#allocation6 + $0x1a0] sm:$0xff]
    %v119 = vld [vmem:[#allocation6 + $0x1a8] sm:$0xff]
    %v120 = vld [vmem:[#allocation6 + $0x1b0] sm:$0xff]
    %v121 = vld [vmem:[#allocation6 + $0x1b8] sm:$0xff]
    %v122 = vld [vmem:[#allocation6 + $0x1c0] sm:$0xff]
    %v123 = vld [vmem:[#allocation6 + $0x1c8] sm:$0xff]
    %v124 = vld [vmem:[#allocation6 + $0x1d0] sm:$0xff]
    %v125 = vld [vmem:[#allocation6 + $0x1d8] sm:$0xff]
    %v126 = vld [vmem:[#allocation6 + $0x1e0] sm:$0xff]
    %v127 = vld [vmem:[#allocation6 + $0x1e8] sm:$0xff]
    %v128 = vld [vmem:[#allocation6 + $0x1f0] sm:$0xff]
    %v129 = vld [vmem:[#allocation6 + $0x1f8] sm:$0xff]
    %v132 = vunpack.c.l.b16 %v64
    %v133 = vunpack.c.h.b16 %v64
    %v134 = vunpack.c.l.b16 %v65
    %v135 = vunpack.c.h.b16 %v65
    %v136 = vpack.c.b16 %v134, %v132
    %v137 = vpack.c.b16 %v135, %v133
    %v204 = vunpack.c.l.b16 %v66
    %v205 = vunpack.c.h.b16 %v66
    %v206 = vunpack.c.l.b16 %v67
    %v207 = vunpack.c.h.b16 %v67
    %v208 = vunpack.c.l.b16 %v68
    %v209 = vunpack.c.h.b16 %v68
    %v210 = vunpack.c.l.b16 %v69
    %v211 = vunpack.c.h.b16 %v69
    %v212 = vunpack.c.l.b16 %v70
    %v213 = vunpack.c.h.b16 %v70
    %v214 = vunpack.c.l.b16 %v71
    %v215 = vunpack.c.h.b16 %v71
    %v216 = vunpack.c.l.b16 %v72
    %v217 = vunpack.c.h.b16 %v72
    %v218 = vunpack.c.l.b16 %v73
    %v219 = vunpack.c.h.b16 %v73
    %v220 = vunpack.c.l.b16 %v74
    %v221 = vunpack.c.h.b16 %v74
    %v222 = vunpack.c.l.b16 %v75
    %v223 = vunpack.c.h.b16 %v75
    %v224 = vunpack.c.l.b16 %v76
    %v225 = vunpack.c.h.b16 %v76
    %v226 = vunpack.c.l.b16 %v77
    %v227 = vunpack.c.h.b16 %v77
    %v228 = vunpack.c.l.b16 %v78
    %v229 = vunpack.c.h.b16 %v78
    %v230 = vunpack.c.l.b16 %v79
    %v231 = vunpack.c.h.b16 %v79
    %v232 = vunpack.c.l.b16 %v80
    %v233 = vunpack.c.h.b16 %v80
    %v234 = vunpack.c.l.b16 %v81
    %v235 = vunpack.c.h.b16 %v81
    %v236 = vunpack.c.l.b16 %v82
    %v237 = vunpack.c.h.b16 %v82
    %v238 = vunpack.c.l.b16 %v83
    %v239 = vunpack.c.h.b16 %v83
    %v240 = vunpack.c.l.b16 %v84
    %v241 = vunpack.c.h.b16 %v84
    %v242 = vunpack.c.l.b16 %v85
    %v243 = vunpack.c.h.b16 %v85
    %v244 = vunpack.c.l.b16 %v86
    %v245 = vunpack.c.h.b16 %v86
    %v246 = vunpack.c.l.b16 %v87
    %v247 = vunpack.c.h.b16 %v87
    %v248 = vunpack.c.l.b16 %v88
    %v249 = vunpack.c.h.b16 %v88
    %v250 = vunpack.c.l.b16 %v89
    %v251 = vunpack.c.h.b16 %v89
    %v252 = vunpack.c.l.b16 %v90
    %v253 = vunpack.c.h.b16 %v90
    %v254 = vunpack.c.l.b16 %v91
    %v255 = vunpack.c.h.b16 %v91
    %v256 = vunpack.c.l.b16 %v92
    %v257 = vunpack.c.h.b16 %v92
    %v258 = vunpack.c.l.b16 %v93
    %v259 = vunpack.c.h.b16 %v93
    %v260 = vunpack.c.l.b16 %v94
    %v261 = vunpack.c.h.b16 %v94
    %v262 = vunpack.c.l.b16 %v95
    %v263 = vunpack.c.h.b16 %v95
    %v264 = vunpack.c.l.b16 %v96
    %v265 = vunpack.c.h.b16 %v96
    %v266 = vunpack.c.l.b16 %v97
    %v267 = vunpack.c.h.b16 %v97
    %v268 = vunpack.c.l.b16 %v98
    %v269 = vunpack.c.h.b16 %v98
    %v270 = vunpack.c.l.b16 %v99
    %v271 = vunpack.c.h.b16 %v99
    %v272 = vunpack.c.l.b16 %v100
    %v273 = vunpack.c.h.b16 %v100
    %v274 = vunpack.c.l.b16 %v101
    %v275 = vunpack.c.h.b16 %v101
    %v276 = vunpack.c.l.b16 %v102
    %v277 = vunpack.c.h.b16 %v102
    %v278 = vunpack.c.l.b16 %v103
    %v279 = vunpack.c.h.b16 %v103
    %v280 = vunpack.c.l.b16 %v104
    %v281 = vunpack.c.h.b16 %v104
    %v282 = vunpack.c.l.b16 %v105
    %v283 = vunpack.c.h.b16 %v105
    %v284 = vunpack.c.l.b16 %v106
    %v285 = vunpack.c.h.b16 %v106
    %v286 = vunpack.c.l.b16 %v107
    %v287 = vunpack.c.h.b16 %v107
    %v288 = vunpack.c.l.b16 %v108
    %v289 = vunpack.c.h.b16 %v108
    %v290 = vunpack.c.l.b16 %v109
    %v291 = vunpack.c.h.b16 %v109
    %v292 = vunpack.c.l.b16 %v110
    %v293 = vunpack.c.h.b16 %v110
    %v294 = vunpack.c.l.b16 %v111
    %v295 = vunpack.c.h.b16 %v111
    %v296 = vunpack.c.l.b16 %v112
    %v297 = vunpack.c.h.b16 %v112
    %v298 = vunpack.c.l.b16 %v113
    %v299 = vunpack.c.h.b16 %v113
    %v300 = vunpack.c.l.b16 %v114
    %v301 = vunpack.c.h.b16 %v114
    %v302 = vunpack.c.l.b16 %v115
    %v303 = vunpack.c.h.b16 %v115
    %v304 = vunpack.c.l.b16 %v116
    %v305 = vunpack.c.h.b16 %v116
    %v306 = vunpack.c.l.b16 %v117
    %v307 = vunpack.c.h.b16 %v117
    %v308 = vunpack.c.l.b16 %v118
    %v309 = vunpack.c.h.b16 %v118
    %v310 = vunpack.c.l.b16 %v119
    %v311 = vunpack.c.h.b16 %v119
    %v312 = vunpack.c.l.b16 %v120
    %v313 = vunpack.c.h.b16 %v120
    %v314 = vunpack.c.l.b16 %v121
    %v315 = vunpack.c.h.b16 %v121
    %v316 = vunpack.c.l.b16 %v122
    %v317 = vunpack.c.h.b16 %v122
    %v318 = vunpack.c.l.b16 %v123
    %v319 = vunpack.c.h.b16 %v123
    %v320 = vunpack.c.l.b16 %v124
    %v321 = vunpack.c.h.b16 %v124
    %v322 = vunpack.c.l.b16 %v125
    %v323 = vunpack.c.h.b16 %v125
    %v324 = vunpack.c.l.b16 %v126
    %v325 = vunpack.c.h.b16 %v126
    %v326 = vunpack.c.l.b16 %v127
    %v327 = vunpack.c.h.b16 %v127
    %v328 = vunpack.c.l.b16 %v128
    %v329 = vunpack.c.h.b16 %v128
    %v330 = vunpack.c.l.b16 %v129
    %v331 = vunpack.c.h.b16 %v129
    %v332 = vpack.c.b16 %v208, %v204
    %v333 = vpack.c.b16 %v209, %v205
    %v334 = vpack.c.b16 %v210, %v206
    %v335 = vpack.c.b16 %v211, %v207
    %v336 = vpack.c.b16 %v216, %v212
    %v337 = vpack.c.b16 %v217, %v213
    %v338 = vpack.c.b16 %v218, %v214
    %v339 = vpack.c.b16 %v219, %v215
    %v340 = vpack.c.b16 %v224, %v220
    %v341 = vpack.c.b16 %v225, %v221
    %v342 = vpack.c.b16 %v226, %v222
    %v343 = vpack.c.b16 %v227, %v223
    %v344 = vpack.c.b16 %v232, %v228
    %v345 = vpack.c.b16 %v233, %v229
    %v346 = vpack.c.b16 %v234, %v230
    %v347 = vpack.c.b16 %v235, %v231
    %v348 = vpack.c.b16 %v240, %v236
    %v349 = vpack.c.b16 %v241, %v237
    %v350 = vpack.c.b16 %v242, %v238
    %v351 = vpack.c.b16 %v243, %v239
    %v352 = vpack.c.b16 %v248, %v244
    %v353 = vpack.c.b16 %v249, %v245
    %v354 = vpack.c.b16 %v250, %v246
    %v355 = vpack.c.b16 %v251, %v247
    %v356 = vpack.c.b16 %v256, %v252
    %v357 = vpack.c.b16 %v257, %v253
    %v358 = vpack.c.b16 %v258, %v254
    %v359 = vpack.c.b16 %v259, %v255
    %v360 = vpack.c.b16 %v264, %v260
    %v361 = vpack.c.b16 %v265, %v261
    %v362 = vpack.c.b16 %v266, %v262
    %v363 = vpack.c.b16 %v267, %v263
    %v364 = vpack.c.b16 %v272, %v268
    %v365 = vpack.c.b16 %v273, %v269
    %v366 = vpack.c.b16 %v274, %v270
    %v367 = vpack.c.b16 %v275, %v271
    %v368 = vpack.c.b16 %v280, %v276
    %v369 = vpack.c.b16 %v281, %v277
    %v370 = vpack.c.b16 %v282, %v278
    %v371 = vpack.c.b16 %v283, %v279
    %v372 = vpack.c.b16 %v288, %v284
    %v373 = vpack.c.b16 %v289, %v285
    %v374 = vpack.c.b16 %v290, %v286
    %v375 = vpack.c.b16 %v291, %v287
    %v376 = vpack.c.b16 %v296, %v292
    %v377 = vpack.c.b16 %v297, %v293
    %v378 = vpack.c.b16 %v298, %v294
    %v379 = vpack.c.b16 %v299, %v295
    %v380 = vpack.c.b16 %v304, %v300
    %v381 = vpack.c.b16 %v305, %v301
    %v382 = vpack.c.b16 %v306, %v302
    %v383 = vpack.c.b16 %v307, %v303
    %v384 = vpack.c.b16 %v312, %v308
    %v385 = vpack.c.b16 %v313, %v309
    %v386 = vpack.c.b16 %v314, %v310
    %v387 = vpack.c.b16 %v315, %v311
    %v388 = vpack.c.b16 %v320, %v316
    %v389 = vpack.c.b16 %v321, %v317
    %v390 = vpack.c.b16 %v322, %v318
    %v391 = vpack.c.b16 %v323, %v319
    %v392 = vpack.c.b16 %v328, %v324
    %v393 = vpack.c.b16 %v329, %v325
    %v394 = vpack.c.b16 %v330, %v326
    %v395 = vpack.c.b16 %v331, %v327
    %460 = vmatprep.subr.bf16.mxu0 %v333
    %461 = vmatpush1.bf16.msra.mxu0 %v332
    %462 = vmatprep.subr.bf16.mxu0 %v337
    %463 = vmatpush1.bf16.msra.mxu0 %v336
    %464 = vmatprep.subr.bf16.mxu0 %v341
    %465 = vmatpush1.bf16.msra.mxu0 %v340
    %466 = vmatprep.subr.bf16.mxu0 %v345
    %467 = vmatpush1.bf16.msra.mxu0 %v344
    %468 = vmatprep.subr.bf16.mxu0 %v349
    %469 = vmatpush1.bf16.msra.mxu0 %v348
    %470 = vmatprep.subr.bf16.mxu0 %v353
    %471 = vmatpush1.bf16.msra.mxu0 %v352
    %472 = vmatprep.subr.bf16.mxu0 %v357
    %473 = vmatpush1.bf16.msra.mxu0 %v356
    %474 = vmatprep.subr.bf16.mxu0 %v361
    %475 = vmatpush1.bf16.msra.mxu0 %v360
    %476 = vmatprep.subr.bf16.mxu0 %v365
    %477 = vmatpush1.bf16.msra.mxu0 %v364
    %478 = vmatprep.subr.bf16.mxu0 %v369
    %479 = vmatpush1.bf16.msra.mxu0 %v368
    %480 = vmatprep.subr.bf16.mxu0 %v373
    %481 = vmatpush1.bf16.msra.mxu0 %v372
    %482 = vmatprep.subr.bf16.mxu0 %v377
    %483 = vmatpush1.bf16.msra.mxu0 %v376
    %484 = vmatprep.subr.bf16.mxu0 %v381
    %485 = vmatpush1.bf16.msra.mxu0 %v380
    %486 = vmatprep.subr.bf16.mxu0 %v385
    %487 = vmatpush1.bf16.msra.mxu0 %v384
    %488 = vmatprep.subr.bf16.mxu0 %v389
    %489 = vmatpush1.bf16.msra.mxu0 %v388
    %490 = vmatprep.subr.bf16.mxu0 %v393
    %491 = vmatpush1.bf16.msra.mxu0 %v392
    %492 = vmatprep.mubr.bf16.mxu0 %v137
    %493 = vmatmul.mubr.bf16.gmra.mrb[0].mxu0 %v136
    %v494 = vpop.f32.mrb[0].mxu0
    %v495 = vadd.f32 0.0, %v494
    %v496 = vpop.f32.mrb[0].mxu0
    %v497 = vadd.f32 0.0, %v496
    %v498 = vpop.f32.mrb[0].mxu0
    %v499 = vadd.f32 0.0, %v498
    %v500 = vpop.f32.mrb[0].mxu0
    %v501 = vadd.f32 0.0, %v500
    %502 = vdwg.mxu0
    %503 = vmatprep.subr.bf16.mxu0 %v335
    %504 = vmatpush1.bf16.msra.mxu0 %v334
    %505 = vmatprep.subr.bf16.mxu0 %v339
    %506 = vmatpush1.bf16.msra.mxu0 %v338
    %507 = vmatprep.subr.bf16.mxu0 %v343
    %508 = vmatpush1.bf16.msra.mxu0 %v342
    %509 = vmatprep.subr.bf16.mxu0 %v347
    %510 = vmatpush1.bf16.msra.mxu0 %v346
    %511 = vmatprep.subr.bf16.mxu0 %v351
    %512 = vmatpush1.bf16.msra.mxu0 %v350
    %513 = vmatprep.subr.bf16.mxu0 %v355
    %514 = vmatpush1.bf16.msra.mxu0 %v354
    %515 = vmatprep.subr.bf16.mxu0 %v359
    %516 = vmatpush1.bf16.msra.mxu0 %v358
    %517 = vmatprep.subr.bf16.mxu0 %v363
    %518 = vmatpush1.bf16.msra.mxu0 %v362
    %519 = vmatprep.subr.bf16.mxu0 %v367
    %520 = vmatpush1.bf16.msra.mxu0 %v366
    %521 = vmatprep.subr.bf16.mxu0 %v371
    %522 = vmatpush1.bf16.msra.mxu0 %v370
    %523 = vmatprep.subr.bf16.mxu0 %v375
    %524 = vmatpush1.bf16.msra.mxu0 %v374
    %525 = vmatprep.subr.bf16.mxu0 %v379
    %526 = vmatpush1.bf16.msra.mxu0 %v378
    %527 = vmatprep.subr.bf16.mxu0 %v383
    %528 = vmatpush1.bf16.msra.mxu0 %v382
    %529 = vmatprep.subr.bf16.mxu0 %v387
    %530 = vmatpush1.bf16.msra.mxu0 %v386
    %531 = vmatprep.subr.bf16.mxu0 %v391
    %532 = vmatpush1.bf16.msra.mxu0 %v390
    %533 = vmatprep.subr.bf16.mxu0 %v395
    %534 = vmatpush1.bf16.msra.mxu0 %v394
    %535 = vmatprep.mubr.bf16.mxu0 %v137
    %536 = vmatmul.mubr.bf16.gmra.mrb[0].mxu0 %v136
    %v537 = vpop.f32.mrb[0].mxu0
    %v538 = vadd.f32 0.0, %v537
    %v539 = vpop.f32.mrb[0].mxu0
    %v540 = vadd.f32 0.0, %v539
    %v541 = vpop.f32.mrb[0].mxu0
    %v542 = vadd.f32 0.0, %v541
    %v543 = vpop.f32.mrb[0].mxu0
    %v544 = vadd.f32 0.0, %v543
    %545 = vdwg.mxu0
    %s546 = scalar_lea.vmem [#allocation6], 512
    %v547 = vld [vmem:[%s546] sm:$0xff]
    %v548 = vld [vmem:[%s546 + $0x8] sm:$0xff]
    %v549 = vld [vmem:[%s546 + $0x10] sm:$0xff]
    %v550 = vld [vmem:[%s546 + $0x18] sm:$0xff]
    %v551 = vld [vmem:[%s546 + $0x20] sm:$0xff]
    %v552 = vld [vmem:[%s546 + $0x28] sm:$0xff]
    %v553 = vld [vmem:[%s546 + $0x30] sm:$0xff]
    %v554 = vld [vmem:[%s546 + $0x38] sm:$0xff]
    %v555 = vld [vmem:[%s546 + $0x40] sm:$0xff]
    %v556 = vld [vmem:[%s546 + $0x48] sm:$0xff]
    %v557 = vld [vmem:[%s546 + $0x50] sm:$0xff]
    %v558 = vld [vmem:[%s546 + $0x58] sm:$0xff]
    %v559 = vld [vmem:[%s546 + $0x60] sm:$0xff]
    %v560 = vld [vmem:[%s546 + $0x68] sm:$0xff]
    %v561 = vld [vmem:[%s546 + $0x70] sm:$0xff]
    %v562 = vld [vmem:[%s546 + $0x78] sm:$0xff]
    %v563 = vld [vmem:[%s546 + $0x80] sm:$0xff]
    %v564 = vld [vmem:[%s546 + $0x88] sm:$0xff]
    %v565 = vld [vmem:[%s546 + $0x90] sm:$0xff]
    %v566 = vld [vmem:[%s546 + $0x98] sm:$0xff]
    %v567 = vld [vmem:[%s546 + $0xa0] sm:$0xff]
    %v568 = vld [vmem:[%s546 + $0xa8] sm:$0xff]
    %v569 = vld [vmem:[%s546 + $0xb0] sm:$0xff]
    %v570 = vld [vmem:[%s546 + $0xb8] sm:$0xff]
    %v571 = vld [vmem:[%s546 + $0xc0] sm:$0xff]
    %v572 = vld [vmem:[%s546 + $0xc8] sm:$0xff]
    %v573 = vld [vmem:[%s546 + $0xd0] sm:$0xff]
    %v574 = vld [vmem:[%s546 + $0xd8] sm:$0xff]
    %v575 = vld [vmem:[%s546 + $0xe0] sm:$0xff]
    %v576 = vld [vmem:[%s546 + $0xe8] sm:$0xff]
    %v577 = vld [vmem:[%s546 + $0xf0] sm:$0xff]
    %v578 = vld [vmem:[%s546 + $0xf8] sm:$0xff]
    %v579 = vld [vmem:[%s546 + $0x100] sm:$0xff]
    %v580 = vld [vmem:[%s546 + $0x108] sm:$0xff]
    %v581 = vld [vmem:[%s546 + $0x110] sm:$0xff]
    %v582 = vld [vmem:[%s546 + $0x118] sm:$0xff]
    %v583 = vld [vmem:[%s546 + $0x120] sm:$0xff]
    %v584 = vld [vmem:[%s546 + $0x128] sm:$0xff]
    %v585 = vld [vmem:[%s546 + $0x130] sm:$0xff]
    %v586 = vld [vmem:[%s546 + $0x138] sm:$0xff]
    %v587 = vld [vmem:[%s546 + $0x140] sm:$0xff]
    %v588 = vld [vmem:[%s546 + $0x148] sm:$0xff]
    %v589 = vld [vmem:[%s546 + $0x150] sm:$0xff]
    %v590 = vld [vmem:[%s546 + $0x158] sm:$0xff]
    %v591 = vld [vmem:[%s546 + $0x160] sm:$0xff]
    %v592 = vld [vmem:[%s546 + $0x168] sm:$0xff]
    %v593 = vld [vmem:[%s546 + $0x170] sm:$0xff]
    %v594 = vld [vmem:[%s546 + $0x178] sm:$0xff]
    %v595 = vld [vmem:[%s546 + $0x180] sm:$0xff]
    %v596 = vld [vmem:[%s546 + $0x188] sm:$0xff]
    %v597 = vld [vmem:[%s546 + $0x190] sm:$0xff]
    %v598 = vld [vmem:[%s546 + $0x198] sm:$0xff]
    %v599 = vld [vmem:[%s546 + $0x1a0] sm:$0xff]
    %v600 = vld [vmem:[%s546 + $0x1a8] sm:$0xff]
    %v601 = vld [vmem:[%s546 + $0x1b0] sm:$0xff]
    %v602 = vld [vmem:[%s546 + $0x1b8] sm:$0xff]
    %v603 = vld [vmem:[%s546 + $0x1c0] sm:$0xff]
    %v604 = vld [vmem:[%s546 + $0x1c8] sm:$0xff]
    %v605 = vld [vmem:[%s546 + $0x1d0] sm:$0xff]
    %v606 = vld [vmem:[%s546 + $0x1d8] sm:$0xff]
    %v607 = vld [vmem:[%s546 + $0x1e0] sm:$0xff]
    %v608 = vld [vmem:[%s546 + $0x1e8] sm:$0xff]
    %v609 = vld [vmem:[%s546 + $0x1f0] sm:$0xff]
    %v610 = vld [vmem:[%s546 + $0x1f8] sm:$0xff]
    %v675 = vunpack.c.l.b16 %v547
    %v676 = vunpack.c.h.b16 %v547
    %v677 = vunpack.c.l.b16 %v548
    %v678 = vunpack.c.h.b16 %v548
    %v679 = vunpack.c.l.b16 %v549
    %v680 = vunpack.c.h.b16 %v549
    %v681 = vunpack.c.l.b16 %v550
    %v682 = vunpack.c.h.b16 %v550
    %v683 = vunpack.c.l.b16 %v551
    %v684 = vunpack.c.h.b16 %v551
    %v685 = vunpack.c.l.b16 %v552
    %v686 = vunpack.c.h.b16 %v552
    %v687 = vunpack.c.l.b16 %v553
    %v688 = vunpack.c.h.b16 %v553
    %v689 = vunpack.c.l.b16 %v554
    %v690 = vunpack.c.h.b16 %v554
    %v691 = vunpack.c.l.b16 %v555
    %v692 = vunpack.c.h.b16 %v555
    %v693 = vunpack.c.l.b16 %v556
    %v694 = vunpack.c.h.b16 %v556
    %v695 = vunpack.c.l.b16 %v557
    %v696 = vunpack.c.h.b16 %v557
    %v697 = vunpack.c.l.b16 %v558
    %v698 = vunpack.c.h.b16 %v558
    %v699 = vunpack.c.l.b16 %v559
    %v700 = vunpack.c.h.b16 %v559
    %v701 = vunpack.c.l.b16 %v560
    %v702 = vunpack.c.h.b16 %v560
    %v703 = vunpack.c.l.b16 %v561
    %v704 = vunpack.c.h.b16 %v561
    %v705 = vunpack.c.l.b16 %v562
    %v706 = vunpack.c.h.b16 %v562
    %v707 = vunpack.c.l.b16 %v563
    %v708 = vunpack.c.h.b16 %v563
    %v709 = vunpack.c.l.b16 %v564
    %v710 = vunpack.c.h.b16 %v564
    %v711 = vunpack.c.l.b16 %v565
    %v712 = vunpack.c.h.b16 %v565
    %v713 = vunpack.c.l.b16 %v566
    %v714 = vunpack.c.h.b16 %v566
    %v715 = vunpack.c.l.b16 %v567
    %v716 = vunpack.c.h.b16 %v567
    %v717 = vunpack.c.l.b16 %v568
    %v718 = vunpack.c.h.b16 %v568
    %v719 = vunpack.c.l.b16 %v569
    %v720 = vunpack.c.h.b16 %v569
    %v721 = vunpack.c.l.b16 %v570
    %v722 = vunpack.c.h.b16 %v570
    %v723 = vunpack.c.l.b16 %v571
    %v724 = vunpack.c.h.b16 %v571
    %v725 = vunpack.c.l.b16 %v572
    %v726 = vunpack.c.h.b16 %v572
    %v727 = vunpack.c.l.b16 %v573
    %v728 = vunpack.c.h.b16 %v573
    %v729 = vunpack.c.l.b16 %v574
    %v730 = vunpack.c.h.b16 %v574
    %v731 = vunpack.c.l.b16 %v575
    %v732 = vunpack.c.h.b16 %v575
    %v733 = vunpack.c.l.b16 %v576
    %v734 = vunpack.c.h.b16 %v576
    %v735 = vunpack.c.l.b16 %v577
    %v736 = vunpack.c.h.b16 %v577
    %v737 = vunpack.c.l.b16 %v578
    %v738 = vunpack.c.h.b16 %v578
    %v739 = vunpack.c.l.b16 %v579
    %v740 = vunpack.c.h.b16 %v579
    %v741 = vunpack.c.l.b16 %v580
    %v742 = vunpack.c.h.b16 %v580
    %v743 = vunpack.c.l.b16 %v581
    %v744 = vunpack.c.h.b16 %v581
    %v745 = vunpack.c.l.b16 %v582
    %v746 = vunpack.c.h.b16 %v582
    %v747 = vunpack.c.l.b16 %v583
    %v748 = vunpack.c.h.b16 %v583
    %v749 = vunpack.c.l.b16 %v584
    %v750 = vunpack.c.h.b16 %v584
    %v751 = vunpack.c.l.b16 %v585
    %v752 = vunpack.c.h.b16 %v585
    %v753 = vunpack.c.l.b16 %v586
    %v754 = vunpack.c.h.b16 %v586
    %v755 = vunpack.c.l.b16 %v587
    %v756 = vunpack.c.h.b16 %v587
    %v757 = vunpack.c.l.b16 %v588
    %v758 = vunpack.c.h.b16 %v588
    %v759 = vunpack.c.l.b16 %v589
    %v760 = vunpack.c.h.b16 %v589
    %v761 = vunpack.c.l.b16 %v590
    %v762 = vunpack.c.h.b16 %v590
    %v763 = vunpack.c.l.b16 %v591
    %v764 = vunpack.c.h.b16 %v591
    %v765 = vunpack.c.l.b16 %v592
    %v766 = vunpack.c.h.b16 %v592
    %v767 = vunpack.c.l.b16 %v593
    %v768 = vunpack.c.h.b16 %v593
    %v769 = vunpack.c.l.b16 %v594
    %v770 = vunpack.c.h.b16 %v594
    %v771 = vunpack.c.l.b16 %v595
    %v772 = vunpack.c.h.b16 %v595
    %v773 = vunpack.c.l.b16 %v596
    %v774 = vunpack.c.h.b16 %v596
    %v775 = vunpack.c.l.b16 %v597
    %v776 = vunpack.c.h.b16 %v597
    %v777 = vunpack.c.l.b16 %v598
    %v778 = vunpack.c.h.b16 %v598
    %v779 = vunpack.c.l.b16 %v599
    %v780 = vunpack.c.h.b16 %v599
    %v781 = vunpack.c.l.b16 %v600
    %v782 = vunpack.c.h.b16 %v600
    %v783 = vunpack.c.l.b16 %v601
    %v784 = vunpack.c.h.b16 %v601
    %v785 = vunpack.c.l.b16 %v602
    %v786 = vunpack.c.h.b16 %v602
    %v787 = vunpack.c.l.b16 %v603
    %v788 = vunpack.c.h.b16 %v603
    %v789 = vunpack.c.l.b16 %v604
    %v790 = vunpack.c.h.b16 %v604
    %v791 = vunpack.c.l.b16 %v605
    %v792 = vunpack.c.h.b16 %v605
    %v793 = vunpack.c.l.b16 %v606
    %v794 = vunpack.c.h.b16 %v606
    %v795 = vunpack.c.l.b16 %v607
    %v796 = vunpack.c.h.b16 %v607
    %v797 = vunpack.c.l.b16 %v608
    %v798 = vunpack.c.h.b16 %v608
    %v799 = vunpack.c.l.b16 %v609
    %v800 = vunpack.c.h.b16 %v609
    %v801 = vunpack.c.l.b16 %v610
    %v802 = vunpack.c.h.b16 %v610
    %v803 = vpack.c.b16 %v679, %v675
    %v804 = vpack.c.b16 %v680, %v676
    %v805 = vpack.c.b16 %v681, %v677
    %v806 = vpack.c.b16 %v682, %v678
    %v807 = vpack.c.b16 %v687, %v683
    %v808 = vpack.c.b16 %v688, %v684
    %v809 = vpack.c.b16 %v689, %v685
    %v810 = vpack.c.b16 %v690, %v686
    %v811 = vpack.c.b16 %v695, %v691
    %v812 = vpack.c.b16 %v696, %v692
    %v813 = vpack.c.b16 %v697, %v693
    %v814 = vpack.c.b16 %v698, %v694
    %v815 = vpack.c.b16 %v703, %v699
    %v816 = vpack.c.b16 %v704, %v700
    %v817 = vpack.c.b16 %v705, %v701
    %v818 = vpack.c.b16 %v706, %v702
    %v819 = vpack.c.b16 %v711, %v707
    %v820 = vpack.c.b16 %v712, %v708
    %v821 = vpack.c.b16 %v713, %v709
    %v822 = vpack.c.b16 %v714, %v710
    %v823 = vpack.c.b16 %v719, %v715
    %v824 = vpack.c.b16 %v720, %v716
    %v825 = vpack.c.b16 %v721, %v717
    %v826 = vpack.c.b16 %v722, %v718
    %v827 = vpack.c.b16 %v727, %v723
    %v828 = vpack.c.b16 %v728, %v724
    %v829 = vpack.c.b16 %v729, %v725
    %v830 = vpack.c.b16 %v730, %v726
    %v831 = vpack.c.b16 %v735, %v731
    %v832 = vpack.c.b16 %v736, %v732
    %v833 = vpack.c.b16 %v737, %v733
    %v834 = vpack.c.b16 %v738, %v734
    %v835 = vpack.c.b16 %v743, %v739
    %v836 = vpack.c.b16 %v744, %v740
    %v837 = vpack.c.b16 %v745, %v741
    %v838 = vpack.c.b16 %v746, %v742
    %v839 = vpack.c.b16 %v751, %v747
    %v840 = vpack.c.b16 %v752, %v748
    %v841 = vpack.c.b16 %v753, %v749
    %v842 = vpack.c.b16 %v754, %v750
    %v843 = vpack.c.b16 %v759, %v755
    %v844 = vpack.c.b16 %v760, %v756
    %v845 = vpack.c.b16 %v761, %v757
    %v846 = vpack.c.b16 %v762, %v758
    %v847 = vpack.c.b16 %v767, %v763
    %v848 = vpack.c.b16 %v768, %v764
    %v849 = vpack.c.b16 %v769, %v765
    %v850 = vpack.c.b16 %v770, %v766
    %v851 = vpack.c.b16 %v775, %v771
    %v852 = vpack.c.b16 %v776, %v772
    %v853 = vpack.c.b16 %v777, %v773
    %v854 = vpack.c.b16 %v778, %v774
    %v855 = vpack.c.b16 %v783, %v779
    %v856 = vpack.c.b16 %v784, %v780
    %v857 = vpack.c.b16 %v785, %v781
    %v858 = vpack.c.b16 %v786, %v782
    %v859 = vpack.c.b16 %v791, %v787
    %v860 = vpack.c.b16 %v792, %v788
    %v861 = vpack.c.b16 %v793, %v789
    %v862 = vpack.c.b16 %v794, %v790
    %v863 = vpack.c.b16 %v799, %v795
    %v864 = vpack.c.b16 %v800, %v796
    %v865 = vpack.c.b16 %v801, %v797
    %v866 = vpack.c.b16 %v802, %v798
    %931 = vmatprep.subr.bf16.mxu0 %v804
    %932 = vmatpush1.bf16.msra.mxu0 %v803
    %933 = vmatprep.subr.bf16.mxu0 %v808
    %934 = vmatpush1.bf16.msra.mxu0 %v807
    %935 = vmatprep.subr.bf16.mxu0 %v812
    %936 = vmatpush1.bf16.msra.mxu0 %v811
    %937 = vmatprep.subr.bf16.mxu0 %v816
    %938 = vmatpush1.bf16.msra.mxu0 %v815
    %939 = vmatprep.subr.bf16.mxu0 %v820
    %940 = vmatpush1.bf16.msra.mxu0 %v819
    %941 = vmatprep.subr.bf16.mxu0 %v824
    %942 = vmatpush1.bf16.msra.mxu0 %v823
    %943 = vmatprep.subr.bf16.mxu0 %v828
    %944 = vmatpush1.bf16.msra.mxu0 %v827
    %945 = vmatprep.subr.bf16.mxu0 %v832
    %946 = vmatpush1.bf16.msra.mxu0 %v831
    %947 = vmatprep.subr.bf16.mxu0 %v836
    %948 = vmatpush1.bf16.msra.mxu0 %v835
    %949 = vmatprep.subr.bf16.mxu0 %v840
    %950 = vmatpush1.bf16.msra.mxu0 %v839
    %951 = vmatprep.subr.bf16.mxu0 %v844
    %952 = vmatpush1.bf16.msra.mxu0 %v843
    %953 = vmatprep.subr.bf16.mxu0 %v848
    %954 = vmatpush1.bf16.msra.mxu0 %v847
    %955 = vmatprep.subr.bf16.mxu0 %v852
    %956 = vmatpush1.bf16.msra.mxu0 %v851
    %957 = vmatprep.subr.bf16.mxu0 %v856
    %958 = vmatpush1.bf16.msra.mxu0 %v855
    %959 = vmatprep.subr.bf16.mxu0 %v860
    %960 = vmatpush1.bf16.msra.mxu0 %v859
    %961 = vmatprep.subr.bf16.mxu0 %v864
    %962 = vmatpush1.bf16.msra.mxu0 %v863
    %963 = vmatprep.mubr.bf16.mxu0 %v137
    %964 = vmatmul.mubr.bf16.gmra.mrb[0].mxu0 %v136
    %v965 = vpop.f32.mrb[0].mxu0
    %v966 = vadd.f32 0.0, %v965
    %v967 = vpop.f32.mrb[0].mxu0
    %v968 = vadd.f32 0.0, %v967
    %v969 = vpop.f32.mrb[0].mxu0
    %v970 = vadd.f32 0.0, %v969
    %v971 = vpop.f32.mrb[0].mxu0
    %v972 = vadd.f32 0.0, %v971
    %973 = vdwg.mxu0
    %974 = vmatprep.subr.bf16.mxu0 %v806
    %975 = vmatpush1.bf16.msra.mxu0 %v805
    %976 = vmatprep.subr.bf16.mxu0 %v810
    %977 = vmatpush1.bf16.msra.mxu0 %v809
    %978 = vmatprep.subr.bf16.mxu0 %v814
    %979 = vmatpush1.bf16.msra.mxu0 %v813
    %980 = vmatprep.subr.bf16.mxu0 %v818
    %981 = vmatpush1.bf16.msra.mxu0 %v817
    %982 = vmatprep.subr.bf16.mxu0 %v822
    %983 = vmatpush1.bf16.msra.mxu0 %v821
    %984 = vmatprep.subr.bf16.mxu0 %v826
    %985 = vmatpush1.bf16.msra.mxu0 %v825
    %986 = vmatprep.subr.bf16.mxu0 %v830
    %987 = vmatpush1.bf16.msra.mxu0 %v829
    %988 = vmatprep.subr.bf16.mxu0 %v834
    %989 = vmatpush1.bf16.msra.mxu0 %v833
    %990 = vmatprep.subr.bf16.mxu0 %v838
    %991 = vmatpush1.bf16.msra.mxu0 %v837
    %992 = vmatprep.subr.bf16.mxu0 %v842
    %993 = vmatpush1.bf16.msra.mxu0 %v841
    %994 = vmatprep.subr.bf16.mxu0 %v846
    %995 = vmatpush1.bf16.msra.mxu0 %v845
    %996 = vmatprep.subr.bf16.mxu0 %v850
    %997 = vmatpush1.bf16.msra.mxu0 %v849
    %998 = vmatprep.subr.bf16.mxu0 %v854
    %999 = vmatpush1.bf16.msra.mxu0 %v853
    %1000 = vmatprep.subr.bf16.mxu0 %v858
    %1001 = vmatpush1.bf16.msra.mxu0 %v857
    %1002 = vmatprep.subr.bf16.mxu0 %v862
    %1003 = vmatpush1.bf16.msra.mxu0 %v861
    %1004 = vmatprep.subr.bf16.mxu0 %v866
    %1005 = vmatpush1.bf16.msra.mxu0 %v865
    %1006 = vmatprep.mubr.bf16.mxu0 %v137
    %1007 = vmatmul.mubr.bf16.gmra.mrb[0].mxu0 %v136
    %v1008 = vpop.f32.mrb[0].mxu0
    %v1009 = vadd.f32 0.0, %v1008
    %v1010 = vpop.f32.mrb[0].mxu0
    %v1011 = vadd.f32 0.0, %v1010
    %v1012 = vpop.f32.mrb[0].mxu0
    %v1013 = vadd.f32 0.0, %v1012
    %v1014 = vpop.f32.mrb[0].mxu0
    %v1015 = vadd.f32 0.0, %v1014
    %1016 = vdwg.mxu0
    %v1017 = vxor.u32 %v495, 2147483648
    %v1018 = vxor.u32 %v497, 2147483648
    %v1019 = vxor.u32 %v538, 2147483648
    %v1020 = vxor.u32 %v540, 2147483648
    %v1021 = vxor.u32 %v499, 2147483648
    %v1022 = vxor.u32 %v501, 2147483648
    %v1023 = vxor.u32 %v542, 2147483648
    %v1024 = vxor.u32 %v544, 2147483648
    %v1025 = vmul.f32 %v1017, 1.442695
    %v1026 = vpow.pop %v1025
    %v1027 = vmul.f32 %v1018, 1.442695
    %v1028 = vpow.pop %v1027
    %v1029 = vmul.f32 %v1019, 1.442695
    %v1030 = vpow.pop %v1029
    %v1031 = vmul.f32 %v1020, 1.442695
    %v1032 = vpow.pop %v1031
    %v1033 = vmul.f32 %v1021, 1.442695
    %v1034 = vpow.pop %v1033
    %v1035 = vmul.f32 %v1022, 1.442695
    %v1036 = vpow.pop %v1035
    %v1037 = vmul.f32 %v1023, 1.442695
    %v1038 = vpow.pop %v1037
    %v1039 = vmul.f32 %v1024, 1.442695
    %v1040 = vpow.pop %v1039
    %v1041 = vadd.f32 %v1026, 1.0
    %v1042 = vadd.f32 %v1028, 1.0
    %v1043 = vadd.f32 %v1030, 1.0
    %v1044 = vadd.f32 %v1032, 1.0
    %v1045 = vadd.f32 %v1034, 1.0
    %v1046 = vadd.f32 %v1036, 1.0
    %v1047 = vadd.f32 %v1038, 1.0
    %v1048 = vadd.f32 %v1040, 1.0
    %v1049 = vrcp.pop %v1041
    %v1050 = vmul.f32 1.0, %v1049
    %v1051 = vrcp.pop %v1042
    %v1052 = vmul.f32 1.0, %v1051
    %v1053 = vrcp.pop %v1043
    %v1054 = vmul.f32 1.0, %v1053
    %v1055 = vrcp.pop %v1044
    %v1056 = vmul.f32 1.0, %v1055
    %v1057 = vrcp.pop %v1045
    %v1058 = vmul.f32 1.0, %v1057
    %v1059 = vrcp.pop %v1046
    %v1060 = vmul.f32 1.0, %v1059
    %v1061 = vrcp.pop %v1047
    %v1062 = vmul.f32 1.0, %v1061
    %v1063 = vrcp.pop %v1048
    %v1064 = vmul.f32 1.0, %v1063
    %v1065 = vmul.f32 %v495, %v1050
    %v1066 = vmul.f32 %v497, %v1052
    %v1067 = vmul.f32 %v538, %v1054
    %v1068 = vmul.f32 %v540, %v1056
    %v1069 = vmul.f32 %v499, %v1058
    %v1070 = vmul.f32 %v501, %v1060
    %v1071 = vmul.f32 %v542, %v1062
    %v1072 = vmul.f32 %v544, %v1064
    %v1073 = vmul.f32 %v1065, %v966
    %v1074 = vmul.f32 %v1066, %v968
    %v1075 = vmul.f32 %v1067, %v1009
    %v1076 = vmul.f32 %v1068, %v1011
    %v1077 = vmul.f32 %v1069, %v970
    %v1078 = vmul.f32 %v1070, %v972
    %v1079 = vmul.f32 %v1071, %v1013
    %v1080 = vmul.f32 %v1072, %v1015
    %v1081 = vpack.c.bf16 %v1077, %v1073
    %v1082 = vpack.c.bf16 %v1078, %v1074
    %v1083 = vpack.c.bf16 %v1079, %v1075
    %v1084 = vpack.c.bf16 %v1080, %v1076
    %v1085 = vld [vmem:[#allocation2] sm:$0xff]
    %v1086 = vld [vmem:[#allocation2 + $0x8] sm:$0xff]
    %v1087 = vld [vmem:[#allocation2 + $0x10] sm:$0xff]
    %v1088 = vld [vmem:[#allocation2 + $0x18] sm:$0xff]
    %v1089 = vld [vmem:[#allocation8] sm:$0xff]
    %v1090 = vld [vmem:[#allocation8 + $0x8] sm:$0xff]
    %v1091 = vld [vmem:[#allocation8 + $0x10] sm:$0xff]
    %v1092 = vld [vmem:[#allocation8 + $0x18] sm:$0xff]
    %v1093 = vld [vmem:[#allocation8 + $0x20] sm:$0xff]
    %v1094 = vld [vmem:[#allocation8 + $0x28] sm:$0xff]
    %v1095 = vld [vmem:[#allocation8 + $0x30] sm:$0xff]
    %v1096 = vld [vmem:[#allocation8 + $0x38] sm:$0xff]
    %v1097 = vld [vmem:[#allocation8 + $0x40] sm:$0xff]
    %v1098 = vld [vmem:[#allocation8 + $0x48] sm:$0xff]
    %v1099 = vld [vmem:[#allocation8 + $0x50] sm:$0xff]
    %v1100 = vld [vmem:[#allocation8 + $0x58] sm:$0xff]
    %v1101 = vld [vmem:[#allocation8 + $0x60] sm:$0xff]
    %v1102 = vld [vmem:[#allocation8 + $0x68] sm:$0xff]
    %v1103 = vld [vmem:[#allocation8 + $0x70] sm:$0xff]
    %v1104 = vld [vmem:[#allocation8 + $0x78] sm:$0xff]
    %v1105 = vld [vmem:[#allocation8 + $0x80] sm:$0xff]
    %v1106 = vld [vmem:[#allocation8 + $0x88] sm:$0xff]
    %v1107 = vld [vmem:[#allocation8 + $0x90] sm:$0xff]
    %v1108 = vld [vmem:[#allocation8 + $0x98] sm:$0xff]
    %v1109 = vld [vmem:[#allocation8 + $0xa0] sm:$0xff]
    %v1110 = vld [vmem:[#allocation8 + $0xa8] sm:$0xff]
    %v1111 = vld [vmem:[#allocation8 + $0xb0] sm:$0xff]
    %v1112 = vld [vmem:[#allocation8 + $0xb8] sm:$0xff]
    %v1113 = vld [vmem:[#allocation8 + $0xc0] sm:$0xff]
    %v1114 = vld [vmem:[#allocation8 + $0xc8] sm:$0xff]
    %v1115 = vld [vmem:[#allocation8 + $0xd0] sm:$0xff]
    %v1116 = vld [vmem:[#allocation8 + $0xd8] sm:$0xff]
    %v1117 = vld [vmem:[#allocation8 + $0xe0] sm:$0xff]
    %v1118 = vld [vmem:[#allocation8 + $0xe8] sm:$0xff]
    %v1119 = vld [vmem:[#allocation8 + $0xf0] sm:$0xff]
    %v1120 = vld [vmem:[#allocation8 + $0xf8] sm:$0xff]
    %v1121 = vld [vmem:[#allocation8 + $0x100] sm:$0xff]
    %v1122 = vld [vmem:[#allocation8 + $0x108] sm:$0xff]
    %v1123 = vld [vmem:[#allocation8 + $0x110] sm:$0xff]
    %v1124 = vld [vmem:[#allocation8 + $0x118] sm:$0xff]
    %v1125 = vld [vmem:[#allocation8 + $0x120] sm:$0xff]
    %v1126 = vld [vmem:[#allocation8 + $0x128] sm:$0xff]
    %v1127 = vld [vmem:[#allocation8 + $0x130] sm:$0xff]
    %v1128 = vld [vmem:[#allocation8 + $0x138] sm:$0xff]
    %v1129 = vld [vmem:[#allocation8 + $0x140] sm:$0xff]
    %v1130 = vld [vmem:[#allocation8 + $0x148] sm:$0xff]
    %v1131 = vld [vmem:[#allocation8 + $0x150] sm:$0xff]
    %v1132 = vld [vmem:[#allocation8 + $0x158] sm:$0xff]
    %v1133 = vld [vmem:[#allocation8 + $0x160] sm:$0xff]
    %v1134 = vld [vmem:[#allocation8 + $0x168] sm:$0xff]
    %v1135 = vld [vmem:[#allocation8 + $0x170] sm:$0xff]
    %v1136 = vld [vmem:[#allocation8 + $0x178] sm:$0xff]
    %v1137 = vld [vmem:[#allocation8 + $0x180] sm:$0xff]
    %v1138 = vld [vmem:[#allocation8 + $0x188] sm:$0xff]
    %v1139 = vld [vmem:[#allocation8 + $0x190] sm:$0xff]
    %v1140 = vld [vmem:[#allocation8 + $0x198] sm:$0xff]
    %v1141 = vld [vmem:[#allocation8 + $0x1a0] sm:$0xff]
    %v1142 = vld [vmem:[#allocation8 + $0x1a8] sm:$0xff]
    %v1143 = vld [vmem:[#allocation8 + $0x1b0] sm:$0xff]
    %v1144 = vld [vmem:[#allocation8 + $0x1b8] sm:$0xff]
    %v1145 = vld [vmem:[#allocation8 + $0x1c0] sm:$0xff]
    %v1146 = vld [vmem:[#allocation8 + $0x1c8] sm:$0xff]
    %v1147 = vld [vmem:[#allocation8 + $0x1d0] sm:$0xff]
    %v1148 = vld [vmem:[#allocation8 + $0x1d8] sm:$0xff]
    %v1149 = vld [vmem:[#allocation8 + $0x1e0] sm:$0xff]
    %v1150 = vld [vmem:[#allocation8 + $0x1e8] sm:$0xff]
    %v1151 = vld [vmem:[#allocation8 + $0x1f0] sm:$0xff]
    %v1152 = vld [vmem:[#allocation8 + $0x1f8] sm:$0xff]
    %v1217 = vunpack.c.l.b16 %v1089
    %v1218 = vunpack.c.h.b16 %v1089
    %v1219 = vunpack.c.l.b16 %v1090
    %v1220 = vunpack.c.h.b16 %v1090
    %v1221 = vunpack.c.l.b16 %v1091
    %v1222 = vunpack.c.h.b16 %v1091
    %v1223 = vunpack.c.l.b16 %v1092
    %v1224 = vunpack.c.h.b16 %v1092
    %v1225 = vunpack.c.l.b16 %v1093
    %v1226 = vunpack.c.h.b16 %v1093
    %v1227 = vunpack.c.l.b16 %v1094
    %v1228 = vunpack.c.h.b16 %v1094
    %v1229 = vunpack.c.l.b16 %v1095
    %v1230 = vunpack.c.h.b16 %v1095
    %v1231 = vunpack.c.l.b16 %v1096
    %v1232 = vunpack.c.h.b16 %v1096
    %v1233 = vunpack.c.l.b16 %v1097
    %v1234 = vunpack.c.h.b16 %v1097
    %v1235 = vunpack.c.l.b16 %v1098
    %v1236 = vunpack.c.h.b16 %v1098
    %v1237 = vunpack.c.l.b16 %v1099
    %v1238 = vunpack.c.h.b16 %v1099
    %v1239 = vunpack.c.l.b16 %v1100
    %v1240 = vunpack.c.h.b16 %v1100
    %v1241 = vunpack.c.l.b16 %v1101
    %v1242 = vunpack.c.h.b16 %v1101
    %v1243 = vunpack.c.l.b16 %v1102
    %v1244 = vunpack.c.h.b16 %v1102
    %v1245 = vunpack.c.l.b16 %v1103
    %v1246 = vunpack.c.h.b16 %v1103
    %v1247 = vunpack.c.l.b16 %v1104
    %v1248 = vunpack.c.h.b16 %v1104
    %v1249 = vunpack.c.l.b16 %v1105
    %v1250 = vunpack.c.h.b16 %v1105
    %v1251 = vunpack.c.l.b16 %v1106
    %v1252 = vunpack.c.h.b16 %v1106
    %v1253 = vunpack.c.l.b16 %v1107
    %v1254 = vunpack.c.h.b16 %v1107
    %v1255 = vunpack.c.l.b16 %v1108
    %v1256 = vunpack.c.h.b16 %v1108
    %v1257 = vunpack.c.l.b16 %v1109
    %v1258 = vunpack.c.h.b16 %v1109
    %v1259 = vunpack.c.l.b16 %v1110
    %v1260 = vunpack.c.h.b16 %v1110
    %v1261 = vunpack.c.l.b16 %v1111
    %v1262 = vunpack.c.h.b16 %v1111
    %v1263 = vunpack.c.l.b16 %v1112
    %v1264 = vunpack.c.h.b16 %v1112
    %v1265 = vunpack.c.l.b16 %v1113
    %v1266 = vunpack.c.h.b16 %v1113
    %v1267 = vunpack.c.l.b16 %v1114
    %v1268 = vunpack.c.h.b16 %v1114
    %v1269 = vunpack.c.l.b16 %v1115
    %v1270 = vunpack.c.h.b16 %v1115
    %v1271 = vunpack.c.l.b16 %v1116
    %v1272 = vunpack.c.h.b16 %v1116
    %v1273 = vunpack.c.l.b16 %v1117
    %v1274 = vunpack.c.h.b16 %v1117
    %v1275 = vunpack.c.l.b16 %v1118
    %v1276 = vunpack.c.h.b16 %v1118
    %v1277 = vunpack.c.l.b16 %v1119
    %v1278 = vunpack.c.h.b16 %v1119
    %v1279 = vunpack.c.l.b16 %v1120
    %v1280 = vunpack.c.h.b16 %v1120
    %v1281 = vunpack.c.l.b16 %v1121
    %v1282 = vunpack.c.h.b16 %v1121
    %v1283 = vunpack.c.l.b16 %v1122
    %v1284 = vunpack.c.h.b16 %v1122
    %v1285 = vunpack.c.l.b16 %v1123
    %v1286 = vunpack.c.h.b16 %v1123
    %v1287 = vunpack.c.l.b16 %v1124
    %v1288 = vunpack.c.h.b16 %v1124
    %v1289 = vunpack.c.l.b16 %v1125
    %v1290 = vunpack.c.h.b16 %v1125
    %v1291 = vunpack.c.l.b16 %v1126
    %v1292 = vunpack.c.h.b16 %v1126
    %v1293 = vunpack.c.l.b16 %v1127
    %v1294 = vunpack.c.h.b16 %v1127
    %v1295 = vunpack.c.l.b16 %v1128
    %v1296 = vunpack.c.h.b16 %v1128
    %v1297 = vunpack.c.l.b16 %v1129
    %v1298 = vunpack.c.h.b16 %v1129
    %v1299 = vunpack.c.l.b16 %v1130
    %v1300 = vunpack.c.h.b16 %v1130
    %v1301 = vunpack.c.l.b16 %v1131
    %v1302 = vunpack.c.h.b16 %v1131
    %v1303 = vunpack.c.l.b16 %v1132
    %v1304 = vunpack.c.h.b16 %v1132
    %v1305 = vunpack.c.l.b16 %v1133
    %v1306 = vunpack.c.h.b16 %v1133
    %v1307 = vunpack.c.l.b16 %v1134
    %v1308 = vunpack.c.h.b16 %v1134
    %v1309 = vunpack.c.l.b16 %v1135
    %v1310 = vunpack.c.h.b16 %v1135
    %v1311 = vunpack.c.l.b16 %v1136
    %v1312 = vunpack.c.h.b16 %v1136
    %v1313 = vunpack.c.l.b16 %v1137
    %v1314 = vunpack.c.h.b16 %v1137
    %v1315 = vunpack.c.l.b16 %v1138
    %v1316 = vunpack.c.h.b16 %v1138
    %v1317 = vunpack.c.l.b16 %v1139
    %v1318 = vunpack.c.h.b16 %v1139
    %v1319 = vunpack.c.l.b16 %v1140
    %v1320 = vunpack.c.h.b16 %v1140
    %v1321 = vunpack.c.l.b16 %v1141
    %v1322 = vunpack.c.h.b16 %v1141
    %v1323 = vunpack.c.l.b16 %v1142
    %v1324 = vunpack.c.h.b16 %v1142
    %v1325 = vunpack.c.l.b16 %v1143
    %v1326 = vunpack.c.h.b16 %v1143
    %v1327 = vunpack.c.l.b16 %v1144
    %v1328 = vunpack.c.h.b16 %v1144
    %v1329 = vunpack.c.l.b16 %v1145
    %v1330 = vunpack.c.h.b16 %v1145
    %v1331 = vunpack.c.l.b16 %v1146
    %v1332 = vunpack.c.h.b16 %v1146
    %v1333 = vunpack.c.l.b16 %v1147
    %v1334 = vunpack.c.h.b16 %v1147
    %v1335 = vunpack.c.l.b16 %v1148
    %v1336 = vunpack.c.h.b16 %v1148
    %v1337 = vunpack.c.l.b16 %v1149
    %v1338 = vunpack.c.h.b16 %v1149
    %v1339 = vunpack.c.l.b16 %v1150
    %v1340 = vunpack.c.h.b16 %v1150
    %v1341 = vunpack.c.l.b16 %v1151
    %v1342 = vunpack.c.h.b16 %v1151
    %v1343 = vunpack.c.l.b16 %v1152
    %v1344 = vunpack.c.h.b16 %v1152
    %v1345 = vpack.c.b16 %v1219, %v1217
    %v1346 = vpack.c.b16 %v1220, %v1218
    %v1347 = vpack.c.b16 %v1223, %v1221
    %v1348 = vpack.c.b16 %v1224, %v1222
    %v1349 = vpack.c.b16 %v1227, %v1225
    %v1350 = vpack.c.b16 %v1228, %v1226
    %v1351 = vpack.c.b16 %v1231, %v1229
    %v1352 = vpack.c.b16 %v1232, %v1230
    %v1353 = vpack.c.b16 %v1235, %v1233
    %v1354 = vpack.c.b16 %v1236, %v1234
    %v1355 = vpack.c.b16 %v1239, %v1237
    %v1356 = vpack.c.b16 %v1240, %v1238
    %v1357 = vpack.c.b16 %v1243, %v1241
    %v1358 = vpack.c.b16 %v1244, %v1242
    %v1359 = vpack.c.b16 %v1247, %v1245
    %v1360 = vpack.c.b16 %v1248, %v1246
    %v1361 = vpack.c.b16 %v1251, %v1249
    %v1362 = vpack.c.b16 %v1252, %v1250
    %v1363 = vpack.c.b16 %v1255, %v1253
    %v1364 = vpack.c.b16 %v1256, %v1254
    %v1365 = vpack.c.b16 %v1259, %v1257
    %v1366 = vpack.c.b16 %v1260, %v1258
    %v1367 = vpack.c.b16 %v1263, %v1261
    %v1368 = vpack.c.b16 %v1264, %v1262
    %v1369 = vpack.c.b16 %v1267, %v1265
    %v1370 = vpack.c.b16 %v1268, %v1266
    %v1371 = vpack.c.b16 %v1271, %v1269
    %v1372 = vpack.c.b16 %v1272, %v1270
    %v1373 = vpack.c.b16 %v1275, %v1273
    %v1374 = vpack.c.b16 %v1276, %v1274
    %v1375 = vpack.c.b16 %v1279, %v1277
    %v1376 = vpack.c.b16 %v1280, %v1278
    %v1377 = vpack.c.b16 %v1283, %v1281
    %v1378 = vpack.c.b16 %v1284, %v1282
    %v1379 = vpack.c.b16 %v1287, %v1285
    %v1380 = vpack.c.b16 %v1288, %v1286
    %v1381 = vpack.c.b16 %v1291, %v1289
    %v1382 = vpack.c.b16 %v1292, %v1290
    %v1383 = vpack.c.b16 %v1295, %v1293
    %v1384 = vpack.c.b16 %v1296, %v1294
    %v1385 = vpack.c.b16 %v1299, %v1297
    %v1386 = vpack.c.b16 %v1300, %v1298
    %v1387 = vpack.c.b16 %v1303, %v1301
    %v1388 = vpack.c.b16 %v1304, %v1302
    %v1389 = vpack.c.b16 %v1307, %v1305
    %v1390 = vpack.c.b16 %v1308, %v1306
    %v1391 = vpack.c.b16 %v1311, %v1309
    %v1392 = vpack.c.b16 %v1312, %v1310
    %v1393 = vpack.c.b16 %v1315, %v1313
    %v1394 = vpack.c.b16 %v1316, %v1314
    %v1395 = vpack.c.b16 %v1319, %v1317
    %v1396 = vpack.c.b16 %v1320, %v1318
    %v1397 = vpack.c.b16 %v1323, %v1321
    %v1398 = vpack.c.b16 %v1324, %v1322
    %v1399 = vpack.c.b16 %v1327, %v1325
    %v1400 = vpack.c.b16 %v1328, %v1326
    %v1401 = vpack.c.b16 %v1331, %v1329
    %v1402 = vpack.c.b16 %v1332, %v1330
    %v1403 = vpack.c.b16 %v1335, %v1333
    %v1404 = vpack.c.b16 %v1336, %v1334
    %v1405 = vpack.c.b16 %v1339, %v1337
    %v1406 = vpack.c.b16 %v1340, %v1338
    %v1407 = vpack.c.b16 %v1343, %v1341
    %v1408 = vpack.c.b16 %v1344, %v1342
    %1473 = vmatprep.subr.bf16.mxu0 %v1346
    %1474 = vmatpush1.bf16.msra.mxu0 %v1345
    %1475 = vmatprep.subr.bf16.mxu0 %v1348
    %1476 = vmatpush1.bf16.msra.mxu0 %v1347
    %1477 = vmatprep.subr.bf16.mxu0 %v1350
    %1478 = vmatpush1.bf16.msra.mxu0 %v1349
    %1479 = vmatprep.subr.bf16.mxu0 %v1352
    %1480 = vmatpush1.bf16.msra.mxu0 %v1351
    %1481 = vmatprep.subr.bf16.mxu0 %v1354
    %1482 = vmatpush1.bf16.msra.mxu0 %v1353
    %1483 = vmatprep.subr.bf16.mxu0 %v1356
    %1484 = vmatpush1.bf16.msra.mxu0 %v1355
    %1485 = vmatprep.subr.bf16.mxu0 %v1358
    %1486 = vmatpush1.bf16.msra.mxu0 %v1357
    %1487 = vmatprep.subr.bf16.mxu0 %v1360
    %1488 = vmatpush1.bf16.msra.mxu0 %v1359
    %1489 = vmatprep.subr.bf16.mxu0 %v1362
    %1490 = vmatpush1.bf16.msra.mxu0 %v1361
    %1491 = vmatprep.subr.bf16.mxu0 %v1364
    %1492 = vmatpush1.bf16.msra.mxu0 %v1363
    %1493 = vmatprep.subr.bf16.mxu0 %v1366
    %1494 = vmatpush1.bf16.msra.mxu0 %v1365
    %1495 = vmatprep.subr.bf16.mxu0 %v1368
    %1496 = vmatpush1.bf16.msra.mxu0 %v1367
    %1497 = vmatprep.subr.bf16.mxu0 %v1370
    %1498 = vmatpush1.bf16.msra.mxu0 %v1369
    %1499 = vmatprep.subr.bf16.mxu0 %v1372
    %1500 = vmatpush1.bf16.msra.mxu0 %v1371
    %1501 = vmatprep.subr.bf16.mxu0 %v1374
    %1502 = vmatpush1.bf16.msra.mxu0 %v1373
    %1503 = vmatprep.subr.bf16.mxu0 %v1376
    %1504 = vmatpush1.bf16.msra.mxu0 %v1375
    %1505 = vmatprep.mubr.bf16.mxu0 %v1082
    %1506 = vmatmul.mubr.bf16.gmra.mrb[0].mxu0 %v1081
    %v1507 = vpop.f32.mrb[0].mxu0
    %v1508 = vadd.f32 0.0, %v1507
    %v1509 = vpop.f32.mrb[0].mxu0
    %v1510 = vadd.f32 0.0, %v1509
    %v1511 = vpop.f32.mrb[0].mxu0
    %v1512 = vadd.f32 0.0, %v1511
    %v1513 = vpop.f32.mrb[0].mxu0
    %v1514 = vadd.f32 0.0, %v1513
    %1515 = vdwg.mxu0
    %1516 = vmatprep.subr.bf16.mxu0 %v1378
    %1517 = vmatpush1.bf16.msra.mxu0 %v1377
    %1518 = vmatprep.subr.bf16.mxu0 %v1380
    %1519 = vmatpush1.bf16.msra.mxu0 %v1379
    %1520 = vmatprep.subr.bf16.mxu0 %v1382
    %1521 = vmatpush1.bf16.msra.mxu0 %v1381
    %1522 = vmatprep.subr.bf16.mxu0 %v1384
    %1523 = vmatpush1.bf16.msra.mxu0 %v1383
    %1524 = vmatprep.subr.bf16.mxu0 %v1386
    %1525 = vmatpush1.bf16.msra.mxu0 %v1385
    %1526 = vmatprep.subr.bf16.mxu0 %v1388
    %1527 = vmatpush1.bf16.msra.mxu0 %v1387
    %1528 = vmatprep.subr.bf16.mxu0 %v1390
    %1529 = vmatpush1.bf16.msra.mxu0 %v1389
    %1530 = vmatprep.subr.bf16.mxu0 %v1392
    %1531 = vmatpush1.bf16.msra.mxu0 %v1391
    %1532 = vmatprep.subr.bf16.mxu0 %v1394
    %1533 = vmatpush1.bf16.msra.mxu0 %v1393
    %1534 = vmatprep.subr.bf16.mxu0 %v1396
    %1535 = vmatpush1.bf16.msra.mxu0 %v1395
    %1536 = vmatprep.subr.bf16.mxu0 %v1398
    %1537 = vmatpush1.bf16.msra.mxu0 %v1397
    %1538 = vmatprep.subr.bf16.mxu0 %v1400
    %1539 = vmatpush1.bf16.msra.mxu0 %v1399
    %1540 = vmatprep.subr.bf16.mxu0 %v1402
    %1541 = vmatpush1.bf16.msra.mxu0 %v1401
    %1542 = vmatprep.subr.bf16.mxu0 %v1404
    %1543 = vmatpush1.bf16.msra.mxu0 %v1403
    %1544 = vmatprep.subr.bf16.mxu0 %v1406
    %1545 = vmatpush1.bf16.msra.mxu0 %v1405
    %1546 = vmatprep.subr.bf16.mxu0 %v1408
    %1547 = vmatpush1.bf16.msra.mxu0 %v1407
    %1548 = vmatprep.mubr.bf16.mxu0 %v1084
    %1549 = vmatmul.mubr.bf16.gmra.mrb[0].mxu0 %v1083
    %v1550 = vpop.f32.mrb[0].mxu0
    %v1551 = vadd.f32 %v1508, %v1550
    %v1552 = vpop.f32.mrb[0].mxu0
    %v1553 = vadd.f32 %v1510, %v1552
    %v1554 = vpop.f32.mrb[0].mxu0
    %v1555 = vadd.f32 %v1512, %v1554
    %v1556 = vpop.f32.mrb[0].mxu0
    %v1557 = vadd.f32 %v1514, %v1556
    %1558 = vdwg.mxu0
    %v1559 = vadd.f32 %v1085, %v1551
    %v1560 = vadd.f32 %v1086, %v1553
    %v1561 = vadd.f32 %v1087, %v1555
    %v1562 = vadd.f32 %v1088, %v1557
    %1563 = vst [vmem:[#allocation2] sm:$0xff] %v1559
    %1564 = vst [vmem:[#allocation2 + $0x8] sm:$0xff] %v1560
    %1565 = vst [vmem:[#allocation2 + $0x10] sm:$0xff] %v1561
    %1566 = vst [vmem:[#allocation2 + $0x18] sm:$0xff] %v1562
    // Predicated region
    $region30: #{tpu_custom_call.1} parent=1 // pred_check
      %p1567 = pneg %p56
    $region31: #{tpu_custom_call.1} parent=1 // pred_check_branch
      %1569 = sbr.rel (%p1567) target = $region33
    $region32: #{tpu_custom_call.1} parent=1 // pred_region
      %v1570 = vld [vmem:[#allocation2] sm:$0xff]
      %v1571 = vld [vmem:[#allocation2 + $0x8] sm:$0xff]
      %v1572 = vld [vmem:[#allocation2 + $0x10] sm:$0xff]
      %v1573 = vld [vmem:[#allocation2 + $0x18] sm:$0xff]
      %1574 = vst [vmem:[#allocation9] sm:$0xff] %v1570
      %1575 = vst [vmem:[#allocation9 + $0x8] sm:$0xff] %v1571
      %1576 = vst [vmem:[#allocation9 + $0x10] sm:$0xff] %v1572
      %1577 = vst [vmem:[#allocation9 + $0x18] sm:$0xff] %v1573
    $region33: #{tpu_custom_call.1} parent=1 // pred_fallthru
      _
    // Predicated region
    $region34: #{tpu_custom_call.1} parent=1 // pred_check
      _
    $region35: #{tpu_custom_call.1} parent=1 // pred_check_branch
      %1579 = sbr.rel (0) target = $region37
    $region36: #{tpu_custom_call.1} parent=1 // pred_region
      %s1581 = ssub.s32 512, 512
      %1582 = vsyncadd [#allocation5], %s1581
      %s1583 = sshll.u32 [#allocation9], 4
      %s1584 = int_to_ptr.vmem [resolvable:$true] %s1583
      %1589 = dma.vmem_to_hbm [thread:$0]  %s1584, 512, %s3, [#allocation5], 256, 256, 16
    $region37: #{tpu_custom_call.1} parent=1 // pred_fallthru
      _
    // Predicated region
    $region38: #{tpu_custom_call.1} parent=1 // pred_check
      _
    $region39: #{tpu_custom_call.1} parent=1 // pred_check_branch
      %1591 = sbr.rel (0) target = $region41
    $region40: #{tpu_custom_call.1} parent=1 // pred_region
      %1592 = dma.done [#allocation5], 512
    $region41: #{tpu_custom_call.1} parent=1 // pred_fallthru
      _
    %1593 = vsyncpa [#allocation4], 1
    %1594 = vsyncpa [#allocation7], 1
    %1595 = vsyncpa [#allocation5], 1

</llo_original>
